<compile_context>
chip_gen: v6e
topology: v6e:2x2x1
jax: 0.10.0
libtpu: 0.0.40
codegen_flags: <defaults>
</compile_context>

<pallas_src>
import functools

import jax
import jax.numpy as jnp
from jax.experimental import pallas as pl
from jax.experimental.pallas import tpu as pltpu

IN_FEATURES = 512
OUT_FEATURES = 64
DEFAULT_ROW_TILE = 2048     # rows of x per grid step (multiple of 16)
SUBLANE_GRANULE = 16        # bf16 native tile is (16, 128); 16 also works for f32


def _round_up(n: int, m: int) -> int:
    return ((n + m - 1) // m) * m


def _orth_linear_kernel(x_ref, w_ref, o_ref):
    # One (tb, 512) x (512, 64) matmul per grid step on the MXU, f32 accumulate.
    o_ref[...] = jnp.dot(
        x_ref[...], w_ref[...], preferred_element_type=jnp.float32
    ).astype(o_ref.dtype)


@functools.partial(
    jax.jit,
    static_argnames=("row_tile", "compute_dtype", "xla_fallback_max_batch"),
)
def mlp_out_orth512(
    x: jax.Array,
    weight: jax.Array,
    *,
    row_tile: int = DEFAULT_ROW_TILE,
    compute_dtype=jnp.bfloat16,
    xla_fallback_max_batch: int = 128,
) -> jax.Array:
    """Forward of MLP_OUT_ORTH512: y = x @ weight with orthogonal (512, 64) weight."""
    B, D = x.shape
    assert D == IN_FEATURES and weight.shape == (IN_FEATURES, OUT_FEATURES)
    assert row_tile % SUBLANE_GRANULE == 0

    out_dtype = x.dtype

    # Cast to the (narrower) compute dtype.  In a full model this convert fuses
    # with the producer of x; callers with bf16 activations pass them directly.
    x_c = x if x.dtype == compute_dtype else x.astype(compute_dtype)
    w_c = weight if weight.dtype == compute_dtype else weight.astype(compute_dtype)

    # Tiny batches: a single-step pallas_call pays fixed custom-call + DMA setup
    # cost and blocks fusion; let XLA handle it.
    if B <= xla_fallback_max_batch:
        return jnp.dot(
            x_c, w_c, preferred_element_type=jnp.float32
        ).astype(out_dtype)

    # Row-tile selection (no wrapper-side padding; Pallas masks the partial
    # last block).
    if row_tile <= B < 2 * row_tile:
        # Guarantee >= 2 grid steps so v7x's two TensorCores both get work.
        tb = _round_up(pl.cdiv(B, 2), SUBLANE_GRANULE)
    else:
        tb = min(row_tile, _round_up(B, SUBLANE_GRANULE))
    grid = (pl.cdiv(B, tb),)

    compute_itemsize = jnp.dtype(compute_dtype).itemsize
    out_itemsize = jnp.dtype(out_dtype).itemsize
    cost = pl.CostEstimate(
        flops=2 * B * IN_FEATURES * OUT_FEATURES,
        transcendentals=0,
        bytes_accessed=(
            B * IN_FEATURES * compute_itemsize
            + IN_FEATURES * OUT_FEATURES * compute_itemsize
            + B * OUT_FEATURES * out_itemsize
        ),
    )

    out = pl.pallas_call(
        _orth_linear_kernel,
        out_shape=jax.ShapeDtypeStruct((B, OUT_FEATURES), out_dtype),
        grid_spec=pltpu.PrefetchScalarGridSpec(
            num_scalar_prefetch=0,
            grid=grid,
            in_specs=[
                # x: one row-tile per grid step (auto double-buffered pipeline).
                pl.BlockSpec((tb, IN_FEATURES), lambda i: (i, 0)),
                # weight: same block every step -> stays resident in VMEM.
                pl.BlockSpec((IN_FEATURES, OUT_FEATURES), lambda i: (0, 0)),
            ],
            out_specs=pl.BlockSpec((tb, OUT_FEATURES), lambda i: (i, 0)),
        ),
        compiler_params=pltpu.CompilerParams(
            # Row tiles are independent -> shard across TensorCores on v7x.
            dimension_semantics=("parallel",),
        ),
        cost_estimate=cost,
    )(x_c, w_c)

    return out


def make_orthogonal_weight(key: jax.Array) -> jax.Array:
    """Deterministic orthogonal (512, 64) weight (orthonormal columns via QR).

    Mimics geotorch.orthogonal's constraint (W^T W = I) without a checkpoint.
    """
    a = jax.random.normal(key, (IN_FEATURES, OUT_FEATURES), dtype=jnp.float32)
    q, r = jnp.linalg.qr(a)                      # q: (512, 64), orthonormal cols
    q = q * jnp.sign(jnp.diag(r))[None, :]       # canonical sign fix
    return q


if __name__ == "__main__":
    key = jax.random.PRNGKey(0)
    k_x, k_w = jax.random.split(key)
    w = make_orthogonal_weight(k_w)

    def ref(x):
        return jnp.dot(x, w, precision=jax.lax.Precision.HIGHEST)

    # 1) Small batch through the Pallas path (single partial block, bf16 compute).
    x_small = jax.random.normal(k_x, (8, IN_FEATURES), dtype=jnp.float32)
    y_small = jax.block_until_ready(
        mlp_out_orth512(x_small, w, xla_fallback_max_batch=0)
    )
    assert y_small.shape == (8, OUT_FEATURES)
    assert jnp.allclose(y_small, ref(x_small), atol=3e-2, rtol=3e-2)

    # 2) Multi-step grid with a partial last block (no wrapper-side padding),
    #    weight resident across steps.
    x_big = jax.random.normal(k_x, (200, IN_FEATURES), dtype=jnp.float32)
    y_big = jax.block_until_ready(
        mlp_out_orth512(x_big, w, row_tile=64, xla_fallback_max_batch=0)
    )
    assert y_big.shape == (200, OUT_FEATURES)
    assert jnp.allclose(y_big, ref(x_big), atol=3e-2, rtol=3e-2)

    # 3) f32 compute path (matches the PyTorch reference numerics closely).
    y_f32 = jax.block_until_ready(
        mlp_out_orth512(
            x_small, w, compute_dtype=jnp.float32, xla_fallback_max_batch=0
        )
    )
    assert jnp.allclose(y_f32, ref(x_small), atol=1e-3, rtol=1e-3)

    print("KERNEL_OK")
</pallas_src>

<mosaic_0001>
module attributes {stable_mosaic.version = 11 : i64} {
  func.func @_orth_linear_kernel(%arg0: i32, %arg1: memref<16x512xbf16, #tpu.memory_space<vmem>>, %arg2: memref<512x64xbf16, #tpu.memory_space<vmem>>, %arg3: memref<16x64xf32, #tpu.memory_space<vmem>>) attributes {dimension_semantics = [#tpu.dimension_semantics<parallel>], iteration_bounds = array<i64: 1>, scalar_prefetch = 0 : i64, scratch_operands = 0 : i64, tpu.core_type = #tpu.core_type<tc>, window_params = [{transform_indices = @transform_0, window_bounds = array<i64: 16, 512>}, {pipeline_mode = #tpu.pipeline_mode<synchronous>, transform_indices = @transform_1, window_bounds = array<i64: 512, 64>}, {transform_indices = @transform_2, window_bounds = array<i64: 16, 64>}]} {
    %c0 = arith.constant 0 : index
    %c0_0 = arith.constant 0 : index
    %0 = vector.load %arg1[%c0, %c0_0] : memref<16x512xbf16, #tpu.memory_space<vmem>>, vector<16x512xbf16>
    %c0_1 = arith.constant 0 : index
    %c0_2 = arith.constant 0 : index
    %1 = vector.load %arg2[%c0_1, %c0_2] : memref<512x64xbf16, #tpu.memory_space<vmem>>, vector<512x64xbf16>
    %cst = arith.constant dense<0.000000e+00> : vector<16x64xf32>
    %2 = tpu.matmul %0, %1, %cst {dimension_numbers = #tpu.dot_dimension_numbers<[1], [0], [0], [1], [0, 0, 1, 1], [], []>} : vector<16x512xbf16>, vector<512x64xbf16>, vector<16x64xf32> -> vector<16x64xf32>
    %c0_3 = arith.constant 0 : index
    %c0_4 = arith.constant 0 : index
    %3 = vector.load %arg3[%c0_3, %c0_4] : memref<16x64xf32, #tpu.memory_space<vmem>>, vector<16x64xf32>
    tpu.vector_store %arg3[%c0_3, %c0_4], %2 {strides = array<i32>} : memref<16x64xf32, #tpu.memory_space<vmem>>, vector<16x64xf32>,
    return
  }
  func.func @transform_0(%arg0: i32) -> (i32, i32) {
    %c0_i32 = arith.constant 0 : i32
    %c0_i32_0 = arith.constant 0 : i32
    return %arg0, %c0_i32 : i32, i32
  }
  func.func @transform_1(%arg0: i32) -> (i32, i32) {
    %c0_i32 = arith.constant 0 : i32
    %c0_i32_0 = arith.constant 0 : i32
    %c0_i32_1 = arith.constant 0 : i32
    return %c0_i32, %c0_i32_0 : i32, i32
  }
  func.func @transform_2(%arg0: i32) -> (i32, i32) {
    %c0_i32 = arith.constant 0 : i32
    %c0_i32_0 = arith.constant 0 : i32
    return %arg0, %c0_i32 : i32, i32
  }
}

</mosaic_0001>

<llo_original>
// kernel: mlp_out_orth512.1
$region0: #{mlp_out_orth512.1}
  #allocation0 [shape = 'u32[]', space=smem, size = 0x4, offset = 0x4, fixed_abs, tag = 'smem constant byte address 0x4 - core index']
  #allocation1 [shape = 'u32[144,128]{1,0:T(1,128)}', space=vmem, size = 0x12000, scoped, tag = 'internal scratch']
  %s0 = inlined_call_operand.vmem [shape: bf16[8,512], index: 0, kind: input, shape index: {}]
  %s1 = inlined_call_operand.vmem [shape: bf16[512,64], index: 1, kind: input, shape index: {}]
  %s2 = inlined_call_operand.hbm [shape: f32[8,64], index: 2, kind: output, shape index: {}]
  %s3 = sld [smem:[#allocation0]]
  $region18: #{mlp_out_orth512.1} parent=0
    _
  %s5 = ssub.s32 1, %s3
  %s6 = scalar_select 0, %s5, %s3
  $region1: #{mlp_out_orth512.1} parent=0
    #allocation2 [shape = 'u8[8192]{0}', space=vmem, size = 0x2000, scoped, tag = 'output window, operand 0, single buffered']
    #allocation3 [shape = 's32[1]{0}', space=sflag, size = 0x4, scoped, tag = 'scoped memory for mlp_out_orth512.1']
    %7 = vsyncpa [#allocation3], 0
    // Predicated region
    $region2: #{mlp_out_orth512.1} parent=1 // pred_check
      _
    $region3: #{mlp_out_orth512.1} parent=1 // pred_check_branch
      %9 = sbr.rel (0) target = $region5
    $region4: #{mlp_out_orth512.1} parent=1 // pred_region
      _
    $region5: #{mlp_out_orth512.1} parent=1 // pred_fallthru
      _
    // Predicated region
    $region6: #{mlp_out_orth512.1} parent=1 // pred_check
      _
    $region7: #{mlp_out_orth512.1} parent=1 // pred_check_branch
      %11 = sbr.rel (0) target = $region9
    $region8: #{mlp_out_orth512.1} parent=1 // pred_region
      _
    $region9: #{mlp_out_orth512.1} parent=1 // pred_fallthru
      _
    %v13 = vld [vmem:[%s0] sm:$0xff]
    %v14 = vld [vmem:[%s0 + $0x8] sm:$0xff]
    %v15 = vld [vmem:[%s0 + $0x10] sm:$0xff]
    %v16 = vld [vmem:[%s0 + $0x18] sm:$0xff]
    %v17 = vld [vmem:[%s1] sm:$0xf]
    %v18 = vld [vmem:[%s1 + $0x4] sm:$0xf]
    %v19 = vld [vmem:[%s1 + $0x8] sm:$0xf]
    %v20 = vld [vmem:[%s1 + $0xc] sm:$0xf]
    %v21 = vld [vmem:[%s1 + $0x10] sm:$0xf]
    %v22 = vld [vmem:[%s1 + $0x14] sm:$0xf]
    %v23 = vld [vmem:[%s1 + $0x18] sm:$0xf]
    %v24 = vld [vmem:[%s1 + $0x1c] sm:$0xf]
    %v25 = vld [vmem:[%s1 + $0x20] sm:$0xf]
    %v26 = vld [vmem:[%s1 + $0x24] sm:$0xf]
    %v27 = vld [vmem:[%s1 + $0x28] sm:$0xf]
    %v28 = vld [vmem:[%s1 + $0x2c] sm:$0xf]
    %v29 = vld [vmem:[%s1 + $0x30] sm:$0xf]
    %v30 = vld [vmem:[%s1 + $0x34] sm:$0xf]
    %v31 = vld [vmem:[%s1 + $0x38] sm:$0xf]
    %v32 = vld [vmem:[%s1 + $0x3c] sm:$0xf]
    %v33 = vld [vmem:[%s1 + $0x40] sm:$0xf]
    %v34 = vld [vmem:[%s1 + $0x44] sm:$0xf]
    %v35 = vld [vmem:[%s1 + $0x48] sm:$0xf]
    %v36 = vld [vmem:[%s1 + $0x4c] sm:$0xf]
    %v37 = vld [vmem:[%s1 + $0x50] sm:$0xf]
    %v38 = vld [vmem:[%s1 + $0x54] sm:$0xf]
    %v39 = vld [vmem:[%s1 + $0x58] sm:$0xf]
    %v40 = vld [vmem:[%s1 + $0x5c] sm:$0xf]
    %v41 = vld [vmem:[%s1 + $0x60] sm:$0xf]
    %v42 = vld [vmem:[%s1 + $0x64] sm:$0xf]
    %v43 = vld [vmem:[%s1 + $0x68] sm:$0xf]
    %v44 = vld [vmem:[%s1 + $0x6c] sm:$0xf]
    %v45 = vld [vmem:[%s1 + $0x70] sm:$0xf]
    %v46 = vld [vmem:[%s1 + $0x74] sm:$0xf]
    %v47 = vld [vmem:[%s1 + $0x78] sm:$0xf]
    %v48 = vld [vmem:[%s1 + $0x7c] sm:$0xf]
    %v49 = vld [vmem:[%s1 + $0x80] sm:$0xf]
    %v50 = vld [vmem:[%s1 + $0x84] sm:$0xf]
    %v51 = vld [vmem:[%s1 + $0x88] sm:$0xf]
    %v52 = vld [vmem:[%s1 + $0x8c] sm:$0xf]
    %v53 = vld [vmem:[%s1 + $0x90] sm:$0xf]
    %v54 = vld [vmem:[%s1 + $0x94] sm:$0xf]
    %v55 = vld [vmem:[%s1 + $0x98] sm:$0xf]
    %v56 = vld [vmem:[%s1 + $0x9c] sm:$0xf]
    %v57 = vld [vmem:[%s1 + $0xa0] sm:$0xf]
    %v58 = vld [vmem:[%s1 + $0xa4] sm:$0xf]
    %v59 = vld [vmem:[%s1 + $0xa8] sm:$0xf]
    %v60 = vld [vmem:[%s1 + $0xac] sm:$0xf]
    %v61 = vld [vmem:[%s1 + $0xb0] sm:$0xf]
    %v62 = vld [vmem:[%s1 + $0xb4] sm:$0xf]
    %v63 = vld [vmem:[%s1 + $0xb8] sm:$0xf]
    %v64 = vld [vmem:[%s1 + $0xbc] sm:$0xf]
    %v65 = vld [vmem:[%s1 + $0xc0] sm:$0xf]
    %v66 = vld [vmem:[%s1 + $0xc4] sm:$0xf]
    %v67 = vld [vmem:[%s1 + $0xc8] sm:$0xf]
    %v68 = vld [vmem:[%s1 + $0xcc] sm:$0xf]
    %v69 = vld [vmem:[%s1 + $0xd0] sm:$0xf]
    %v70 = vld [vmem:[%s1 + $0xd4] sm:$0xf]
    %v71 = vld [vmem:[%s1 + $0xd8] sm:$0xf]
    %v72 = vld [vmem:[%s1 + $0xdc] sm:$0xf]
    %v73 = vld [vmem:[%s1 + $0xe0] sm:$0xf]
    %v74 = vld [vmem:[%s1 + $0xe4] sm:$0xf]
    %v75 = vld [vmem:[%s1 + $0xe8] sm:$0xf]
    %v76 = vld [vmem:[%s1 + $0xec] sm:$0xf]
    %v77 = vld [vmem:[%s1 + $0xf0] sm:$0xf]
    %v78 = vld [vmem:[%s1 + $0xf4] sm:$0xf]
    %v79 = vld [vmem:[%s1 + $0xf8] sm:$0xf]
    %v80 = vld [vmem:[%s1 + $0xfc] sm:$0xf]
    %v85 = vunpack.c.l.b16 %v13
    %v86 = vunpack.c.h.b16 %v13
    %v87 = vunpack.c.l.b16 %v14
    %v88 = vunpack.c.h.b16 %v14
    %v89 = vunpack.c.l.b16 %v15
    %v90 = vunpack.c.h.b16 %v15
    %v91 = vunpack.c.l.b16 %v16
    %v92 = vunpack.c.h.b16 %v16
    %v93 = vpack.c.b16 %v89, %v85
    %v94 = vpack.c.b16 %v90, %v86
    %v95 = vpack.c.b16 %v91, %v87
    %v96 = vpack.c.b16 %v92, %v88
    %v165 = vunpack.c.l.b16 %v17
    %v166 = vunpack.c.l.b16 %v18
    %v167 = vunpack.c.l.b16 %v19
    %v168 = vunpack.c.l.b16 %v20
    %v169 = vunpack.c.l.b16 %v21
    %v170 = vunpack.c.l.b16 %v22
    %v171 = vunpack.c.l.b16 %v23
    %v172 = vunpack.c.l.b16 %v24
    %v173 = vunpack.c.l.b16 %v25
    %v174 = vunpack.c.l.b16 %v26
    %v175 = vunpack.c.l.b16 %v27
    %v176 = vunpack.c.l.b16 %v28
    %v177 = vunpack.c.l.b16 %v29
    %v178 = vunpack.c.l.b16 %v30
    %v179 = vunpack.c.l.b16 %v31
    %v180 = vunpack.c.l.b16 %v32
    %v181 = vunpack.c.l.b16 %v33
    %v182 = vunpack.c.l.b16 %v34
    %v183 = vunpack.c.l.b16 %v35
    %v184 = vunpack.c.l.b16 %v36
    %v185 = vunpack.c.l.b16 %v37
    %v186 = vunpack.c.l.b16 %v38
    %v187 = vunpack.c.l.b16 %v39
    %v188 = vunpack.c.l.b16 %v40
    %v189 = vunpack.c.l.b16 %v41
    %v190 = vunpack.c.l.b16 %v42
    %v191 = vunpack.c.l.b16 %v43
    %v192 = vunpack.c.l.b16 %v44
    %v193 = vunpack.c.l.b16 %v45
    %v194 = vunpack.c.l.b16 %v46
    %v195 = vunpack.c.l.b16 %v47
    %v196 = vunpack.c.l.b16 %v48
    %v197 = vunpack.c.l.b16 %v49
    %v198 = vunpack.c.l.b16 %v50
    %v199 = vunpack.c.l.b16 %v51
    %v200 = vunpack.c.l.b16 %v52
    %v201 = vunpack.c.l.b16 %v53
    %v202 = vunpack.c.l.b16 %v54
    %v203 = vunpack.c.l.b16 %v55
    %v204 = vunpack.c.l.b16 %v56
    %v205 = vunpack.c.l.b16 %v57
    %v206 = vunpack.c.l.b16 %v58
    %v207 = vunpack.c.l.b16 %v59
    %v208 = vunpack.c.l.b16 %v60
    %v209 = vunpack.c.l.b16 %v61
    %v210 = vunpack.c.l.b16 %v62
    %v211 = vunpack.c.l.b16 %v63
    %v212 = vunpack.c.l.b16 %v64
    %v213 = vunpack.c.l.b16 %v65
    %v214 = vunpack.c.l.b16 %v66
    %v215 = vunpack.c.l.b16 %v67
    %v216 = vunpack.c.l.b16 %v68
    %v217 = vunpack.c.l.b16 %v69
    %v218 = vunpack.c.l.b16 %v70
    %v219 = vunpack.c.l.b16 %v71
    %v220 = vunpack.c.l.b16 %v72
    %v221 = vunpack.c.l.b16 %v73
    %v222 = vunpack.c.l.b16 %v74
    %v223 = vunpack.c.l.b16 %v75
    %v224 = vunpack.c.l.b16 %v76
    %v225 = vunpack.c.l.b16 %v77
    %v226 = vunpack.c.l.b16 %v78
    %v227 = vunpack.c.l.b16 %v79
    %v228 = vunpack.c.l.b16 %v80
    %v229 = vpack.c.b16 %v166, %v165
    %v230 = vpack.c.b16 %v168, %v167
    %v231 = vpack.c.b16 %v170, %v169
    %v232 = vpack.c.b16 %v172, %v171
    %v233 = vpack.c.b16 %v174, %v173
    %v234 = vpack.c.b16 %v176, %v175
    %v235 = vpack.c.b16 %v178, %v177
    %v236 = vpack.c.b16 %v180, %v179
    %v237 = vpack.c.b16 %v182, %v181
    %v238 = vpack.c.b16 %v184, %v183
    %v239 = vpack.c.b16 %v186, %v185
    %v240 = vpack.c.b16 %v188, %v187
    %v241 = vpack.c.b16 %v190, %v189
    %v242 = vpack.c.b16 %v192, %v191
    %v243 = vpack.c.b16 %v194, %v193
    %v244 = vpack.c.b16 %v196, %v195
    %v245 = vpack.c.b16 %v198, %v197
    %v246 = vpack.c.b16 %v200, %v199
    %v247 = vpack.c.b16 %v202, %v201
    %v248 = vpack.c.b16 %v204, %v203
    %v249 = vpack.c.b16 %v206, %v205
    %v250 = vpack.c.b16 %v208, %v207
    %v251 = vpack.c.b16 %v210, %v209
    %v252 = vpack.c.b16 %v212, %v211
    %v253 = vpack.c.b16 %v214, %v213
    %v254 = vpack.c.b16 %v216, %v215
    %v255 = vpack.c.b16 %v218, %v217
    %v256 = vpack.c.b16 %v220, %v219
    %v257 = vpack.c.b16 %v222, %v221
    %v258 = vpack.c.b16 %v224, %v223
    %v259 = vpack.c.b16 %v226, %v225
    %v260 = vpack.c.b16 %v228, %v227
    %293 = vmatprep.subr.bf16.mxu0 0
    %294 = vmatpush1.bf16.msra.mxu0 %v236
    %295 = vmatprep.subr.bf16.mxu0 0
    %296 = vmatpush1.bf16.msra.mxu0 %v235
    %297 = vmatprep.subr.bf16.mxu0 0
    %298 = vmatpush1.bf16.msra.mxu0 %v234
    %299 = vmatprep.subr.bf16.mxu0 0
    %300 = vmatpush1.bf16.msra.mxu0 %v233
    %301 = vmatprep.subr.bf16.mxu0 0
    %302 = vmatpush1.bf16.msra.mxu0 %v232
    %303 = vmatprep.subr.bf16.mxu0 0
    %304 = vmatpush1.bf16.msra.mxu0 %v231
    %305 = vmatprep.subr.bf16.mxu0 0
    %306 = vmatpush1.bf16.msra.mxu0 %v230
    %307 = vmatprep.subr.bf16.mxu0 0
    %308 = vmatpush1.bf16.msra.mxu0 %v229
    %309 = vmatprep.subr.bf16.mxu0 0
    %310 = vmatpush2.bf16.msra.mxu0 %v244
    %311 = vmatprep.subr.bf16.mxu0 0
    %312 = vmatpush2.bf16.msra.mxu0 %v243
    %313 = vmatprep.subr.bf16.mxu0 0
    %314 = vmatpush2.bf16.msra.mxu0 %v242
    %315 = vmatprep.subr.bf16.mxu0 0
    %316 = vmatpush2.bf16.msra.mxu0 %v241
    %317 = vmatprep.subr.bf16.mxu0 0
    %318 = vmatpush2.bf16.msra.mxu0 %v240
    %319 = vmatprep.subr.bf16.mxu0 0
    %320 = vmatpush2.bf16.msra.mxu0 %v239
    %321 = vmatprep.subr.bf16.mxu0 0
    %322 = vmatpush2.bf16.msra.mxu0 %v238
    %323 = vmatprep.subr.bf16.mxu0 0
    %324 = vmatpush2.bf16.msra.mxu0 %v237
    %325 = vmatprep.mubr.bf16.mxu0 %v94
    %326 = vmatmul.mubr.bf16.gmra.mxu0 %v93
    %v327 = vpop.f32.mrf.mxu0
    %v328 = vadd.f32 0.0, %v327
    %v329 = vpop.f32.mrf.mxu0
    %v330 = vpop.f32.mrf.mxu0
    %v331 = vadd.f32 0.0, %v330
    %v332 = vpop.f32.mrf.mxu0
    %333 = vdwg.mxu0
    %334 = vmatprep.subr.bf16.mxu0 0
    %335 = vmatpush1.bf16.msra.mxu0 %v252
    %336 = vmatprep.subr.bf16.mxu0 0
    %337 = vmatpush1.bf16.msra.mxu0 %v251
    %338 = vmatprep.subr.bf16.mxu0 0
    %339 = vmatpush1.bf16.msra.mxu0 %v250
    %340 = vmatprep.subr.bf16.mxu0 0
    %341 = vmatpush1.bf16.msra.mxu0 %v249
    %342 = vmatprep.subr.bf16.mxu0 0
    %343 = vmatpush1.bf16.msra.mxu0 %v248
    %344 = vmatprep.subr.bf16.mxu0 0
    %345 = vmatpush1.bf16.msra.mxu0 %v247
    %346 = vmatprep.subr.bf16.mxu0 0
    %347 = vmatpush1.bf16.msra.mxu0 %v246
    %348 = vmatprep.subr.bf16.mxu0 0
    %349 = vmatpush1.bf16.msra.mxu0 %v245
    %350 = vmatprep.subr.bf16.mxu0 0
    %351 = vmatpush2.bf16.msra.mxu0 %v260
    %352 = vmatprep.subr.bf16.mxu0 0
    %353 = vmatpush2.bf16.msra.mxu0 %v259
    %354 = vmatprep.subr.bf16.mxu0 0
    %355 = vmatpush2.bf16.msra.mxu0 %v258
    %356 = vmatprep.subr.bf16.mxu0 0
    %357 = vmatpush2.bf16.msra.mxu0 %v257
    %358 = vmatprep.subr.bf16.mxu0 0
    %359 = vmatpush2.bf16.msra.mxu0 %v256
    %360 = vmatprep.subr.bf16.mxu0 0
    %361 = vmatpush2.bf16.msra.mxu0 %v255
    %362 = vmatprep.subr.bf16.mxu0 0
    %363 = vmatpush2.bf16.msra.mxu0 %v254
    %364 = vmatprep.subr.bf16.mxu0 0
    %365 = vmatpush2.bf16.msra.mxu0 %v253
    %366 = vmatprep.mubr.bf16.mxu0 %v96
    %367 = vmatmul.mubr.bf16.gmra.mxu0 %v95
    %v368 = vpop.f32.mrf.mxu0
    %v369 = vadd.f32 %v328, %v368
    %v370 = vpop.f32.mrf.mxu0
    %v371 = vpop.f32.mrf.mxu0
    %v372 = vadd.f32 %v331, %v371
    %v373 = vpop.f32.mrf.mxu0
    %374 = vdwg.mxu0
    %vm375 = vcmask 523264
    %376 = vst.msk [vmem:[#allocation2] sm:$0xff] %vm375, %v369
    %377 = vst.msk [vmem:[#allocation2 + $0x8] sm:$0xff] %vm375, %v372
    // Predicated region
    $region10: #{mlp_out_orth512.1} parent=1 // pred_check
      _
    $region11: #{mlp_out_orth512.1} parent=1 // pred_check_branch
      %379 = sbr.rel (0) target = $region13
    $region12: #{mlp_out_orth512.1} parent=1 // pred_region
      %s381 = ssub.s32 256, 128
      %382 = vsyncadd [#allocation3], %s381
      %s383 = sshll.u32 [#allocation2], 4
      %s384 = int_to_ptr.vmem [resolvable:$true] %s383
      %389 = dma.vmem_to_hbm [thread:$0]  %s384, 128, %s2, [#allocation3], 128, 128, 8
    $region13: #{mlp_out_orth512.1} parent=1 // pred_fallthru
      _
    // Predicated region
    $region14: #{mlp_out_orth512.1} parent=1 // pred_check
      _
    $region15: #{mlp_out_orth512.1} parent=1 // pred_check_branch
      %391 = sbr.rel (0) target = $region17
    $region16: #{mlp_out_orth512.1} parent=1 // pred_region
      %392 = dma.done [#allocation3], 256
    $region17: #{mlp_out_orth512.1} parent=1 // pred_fallthru
      _
    %393 = vsyncpa [#allocation3], 1

</llo_original>
